<compile_context>
chip_gen: v6e
topology: v6e:2x2x1
jax: 0.10.0
libtpu: 0.0.40
codegen_flags: <defaults>
</compile_context>

<pallas_src>
import jax
import jax.numpy as jnp
from jax.experimental import pallas as pl
from jax.experimental.pallas import tpu as pltpu


_VMEM_LIMIT = 64 * 1024 * 1024   # scoped-VMEM budget; safe on v5e/v6e/v7x


def _round_up(x, m):
    return ((x + m - 1) // m) * m


# ----------------------------------------------------------------------------
# Kernels
# ----------------------------------------------------------------------------

def _self_attn_kernel(tok_ref, wvqk_ref, out_ref):
    """Self-attention, fused [V|Q|K] projection.

    tok_ref : (BB, T, H)   wvqk_ref : (H, Hp + 2E)   out_ref : (BB, T, Hp)
    """
    BB, T, H = tok_ref.shape
    Hp = out_ref.shape[2]
    F = wvqk_ref.shape[1]
    E = (F - Hp) // 2
    dt = tok_ref.dtype

    # One wide projection for the whole batch block: (BB*T, H) @ (H, Hp+2E).
    x2 = tok_ref[...].reshape(BB * T, H)
    vqk = jnp.dot(x2, wvqk_ref[...],
                  preferred_element_type=jnp.float32).reshape(BB, T, F)
    # V segment first -> its 128-wide slice starts at lane 0 (tile aligned).
    v = vqk[..., :Hp].astype(dt)              # (BB, T(=S), Hp)
    q = vqk[..., Hp:Hp + E].astype(dt)        # (BB, T, E)
    k = vqk[..., Hp + E:].astype(dt)          # (BB, S, E)

    # scores[b,t,s]: S on lanes; softmax over t (dim=1) = sublane reduction.
    scores = jnp.einsum('bte,bse->bts', q, k,
                        preferred_element_type=jnp.float32)
    m = jnp.max(scores, axis=1, keepdims=True)
    p = jnp.exp(scores - m)
    denom = jnp.sum(p, axis=1, keepdims=True)
    attn = (p / denom).astype(dt)             # exact reciprocal (review note)

    out = jnp.einsum('bts,bsh->bth', attn, v,
                     preferred_element_type=jnp.float32)
    out_ref[...] = out.astype(out_ref.dtype)  # unmasked, lane-dense store


def _cross_attn_kernel(tok_ref, ctx_ref, wq_ref, wvk_ref, out_ref,
                       q_scr, acc_scr):
    """Cross-attention, fused [V|K] projection, context (S) axis tiled.

    tok_ref : (BB, T, H)      ctx_ref : (BB, St, C)
    wq_ref  : (H, E)          wvk_ref : (C, Hp + E)
    out_ref : (BB, T, Hp)
    q_scr   : (BB, T, E)  input dtype      acc_scr : (BB, T, Hp) f32
    """
    BB, T, H = tok_ref.shape
    E = wq_ref.shape[1]
    _, St, C = ctx_ref.shape
    Hp = out_ref.shape[2]
    dt = tok_ref.dtype
    s_idx = pl.program_id(1)

    @pl.when(s_idx == 0)
    def _():
        # Q computed once per batch block, cached in input dtype.
        x2 = tok_ref[...].reshape(BB * T, H)
        q_scr[...] = jnp.dot(
            x2, wq_ref[...],
            preferred_element_type=jnp.float32).reshape(BB, T, E).astype(q_scr.dtype)
        acc_scr[...] = jnp.zeros_like(acc_scr)

    # Fused V/K projection for this context tile (V first -> aligned slice).
    c2 = ctx_ref[...].reshape(BB * St, C)
    vk = jnp.dot(c2, wvk_ref[...],
                 preferred_element_type=jnp.float32).reshape(BB, St, Hp + E)
    v = vk[..., :Hp].astype(dt)               # (BB, St, Hp)
    k = vk[..., Hp:].astype(dt)               # (BB, St, E)

    q = q_scr[...]
    scores = jnp.einsum('bte,bse->bts', q, k,
                        preferred_element_type=jnp.float32)   # (BB, T, St)
    # Softmax is over t (dim=1) and T is never tiled, so every s column is
    # complete inside this tile and partial outputs simply sum over S tiles.
    # Do NOT tile T or move the softmax axis without adding an online carry.
    m = jnp.max(scores, axis=1, keepdims=True)
    p = jnp.exp(scores - m)
    denom = jnp.sum(p, axis=1, keepdims=True)
    attn = (p / denom).astype(dt)

    acc_scr[...] += jnp.einsum('bts,bsh->bth', attn, v,
                               preferred_element_type=jnp.float32)

    @pl.when(s_idx == pl.num_programs(1) - 1)
    def _():
        out_ref[...] = acc_scr[...].astype(out_ref.dtype)


# ----------------------------------------------------------------------------
# Wrapper
# ----------------------------------------------------------------------------

def _pick_block_b(B, T, block_b):
    """Batch block: fill MXU rows, but keep >=2 parallel steps for v7x TCs."""
    if block_b is None:
        block_b = max(1, -(-256 // T))        # target >= 256 projection rows
    divs = [d for d in range(1, B + 1) if B % d == 0 and d <= block_b]
    bb = max(divs) if divs else B
    if B >= 2 and B // bb < 2:
        smaller = [d for d in divs if B // d >= 2]
        # Split only if it doesn't starve an already-filled MXU block.
        if smaller and (bb * T < 256 or max(smaller) * T >= 256):
            bb = max(smaller)
    return bb


def _pick_block_s(S, C, E, Hp, T, bb, block_s, itemsize):
    """Context tile: VMEM-budget-aware default (v7x only has 64 MiB VMEM)."""
    if block_s is not None:
        st = block_s
    else:
        budget = 16 * 1024 * 1024             # ctx stream + f32 vk + scores
        per_row = bb * (2 * C * itemsize + 4 * (E + Hp) + 4 * T)
        st = max(8, budget // max(per_row, 1))
    if st >= S:
        return S
    st = max(8, (st // 8) * 8)
    while st > 8 and S % st:
        st -= 8
    # TODO(synk): mask ragged S tiles instead of falling back to full S.
    return st if S % st == 0 else S


def cross_attention(tokens, wq_t, wk_t, wv_t, context=None, *,
                    block_b=None, block_s=None, interpret=False):
    """tokens: [B, T, H]; context: [B, S, C] or None (self-attention).

    wq_t: [H, E], wk_t: [C_or_H, E], wv_t: [C_or_H, H] (pre-transposed)."""
    B, T, H = tokens.shape
    E = wq_t.shape[1]
    dtype = tokens.dtype
    itemsize = tokens.dtype.itemsize

    # Lane-align the value / output head dim so the out store is unmasked.
    Hp = _round_up(H, 128)
    wv_p = wv_t if Hp == H else jnp.pad(wv_t, ((0, 0), (0, Hp - H)))

    bb = _pick_block_b(B, T, block_b)
    nb = B // bb

    if context is None:
        # ----- self-attention: fused [V|Q|K] projection ---------------------
        wvqk = jnp.concatenate([wv_p, wq_t, wk_t], axis=1)    # (H, Hp + 2E)
        flops = B * (2 * T * H * (Hp + 2 * E) + 2 * T * T * E + 2 * T * T * Hp)
        cost = pl.CostEstimate(
            flops=int(flops),
            transcendentals=int(B * T * T),
            bytes_accessed=int((tokens.size + B * T * Hp + wvqk.size) * itemsize))
        out = pl.pallas_call(
            _self_attn_kernel,
            out_shape=jax.ShapeDtypeStruct((B, T, Hp), dtype),
            grid_spec=pltpu.PrefetchScalarGridSpec(
                num_scalar_prefetch=0,
                grid=(nb,),
                in_specs=[
                    pl.BlockSpec((bb, T, H), lambda b: (b, 0, 0)),
                    pl.BlockSpec((H, Hp + 2 * E), lambda b: (0, 0)),
                ],
                out_specs=pl.BlockSpec((bb, T, Hp), lambda b: (b, 0, 0)),
            ),
            compiler_params=pltpu.CompilerParams(
                dimension_semantics=("parallel",),
                vmem_limit_bytes=_VMEM_LIMIT),
            cost_estimate=cost,
            interpret=interpret,
        )(tokens, wvqk)
        return out[..., :H] if Hp != H else out

    # ----- cross-attention: fused [V|K] projection, S tiled ------------------
    _, S, C = context.shape
    wvk = jnp.concatenate([wv_p, wk_t], axis=1)               # (C, Hp + E)
    st = _pick_block_s(S, C, E, Hp, T, bb, block_s, itemsize)
    ns = S // st
    flops = B * (2 * T * H * E + 2 * S * C * (E + Hp)
                 + 2 * T * S * E + 2 * T * S * Hp)
    cost = pl.CostEstimate(
        flops=int(flops),
        transcendentals=int(B * T * S),
        bytes_accessed=int((tokens.size + context.size + B * T * Hp
                            + wq_t.size + wvk.size) * itemsize))
    out = pl.pallas_call(
        _cross_attn_kernel,
        out_shape=jax.ShapeDtypeStruct((B, T, Hp), dtype),
        grid_spec=pltpu.PrefetchScalarGridSpec(
            num_scalar_prefetch=0,
            grid=(nb, ns),
            in_specs=[
                pl.BlockSpec((bb, T, H), lambda b, s: (b, 0, 0)),
                pl.BlockSpec((bb, st, C), lambda b, s: (b, s, 0)),
                pl.BlockSpec((H, E), lambda b, s: (0, 0)),
                pl.BlockSpec((C, Hp + E), lambda b, s: (0, 0)),
            ],
            out_specs=pl.BlockSpec((bb, T, Hp), lambda b, s: (b, 0, 0)),
            scratch_shapes=[
                pltpu.VMEM((bb, T, E), dtype),         # cached Q (input dtype)
                pltpu.VMEM((bb, T, Hp), jnp.float32),  # f32 output accumulator
            ],
        ),
        compiler_params=pltpu.CompilerParams(
            dimension_semantics=("parallel", "arbitrary"),
            vmem_limit_bytes=_VMEM_LIMIT),
        cost_estimate=cost,
        interpret=interpret,
    )(tokens, context, wq_t, wvk)
    return out[..., :H] if Hp != H else out


# ----------------------------------------------------------------------------
# Reference + demo
# ----------------------------------------------------------------------------

def _reference(tokens, wq_t, wk_t, wv_t, context=None):
    if context is None:
        context = tokens
    hi = jax.lax.Precision.HIGHEST
    Q = jnp.einsum("bth,he->bte", tokens, wq_t, precision=hi)
    K = jnp.einsum("bsc,ce->bse", context, wk_t, precision=hi)
    V = jnp.einsum("bsc,ch->bsh", context, wv_t, precision=hi)
    scores = jnp.einsum("bte,bse->bts", Q, K, precision=hi)
    attn = jax.nn.softmax(scores, axis=1)     # dim=1 == t axis, as in torch
    return jnp.einsum("bts,bsh->bth", attn, V, precision=hi)


if __name__ == "__main__":
    B, T, H, E = 2, 8, 32, 16       # batch, tokens, hidden_dim, embed_dim

    key = jax.random.PRNGKey(0)
    k_tok, k_q, k_k, k_v, k_ctx, k_ck, k_cv = jax.random.split(key, 7)

    tokens = jax.random.normal(k_tok, (B, T, H), dtype=jnp.float32)

    # nn.Linear(in, out, bias=False)-style init, stored as [in, out].
    bound = 1.0 / (H ** 0.5)
    wq_t = jax.random.uniform(k_q, (H, E), minval=-bound, maxval=bound,
                              dtype=jnp.float32)
    wk_t = jax.random.uniform(k_k, (H, E), minval=-bound, maxval=bound,
                              dtype=jnp.float32)
    wv_t = jax.random.uniform(k_v, (H, H), minval=-bound, maxval=bound,
                              dtype=jnp.float32)

    TOL = 1e-3   # exact softmax reciprocal now; only MXU f32 rounding left

    # --- self-attention path (context_dim=None) -----------------------------
    out = cross_attention(tokens, wq_t, wk_t, wv_t)
    out = jax.block_until_ready(out)
    ref = _reference(tokens, wq_t, wk_t, wv_t)
    assert out.shape == (B, T, H)
    assert jnp.allclose(out, ref, atol=TOL, rtol=TOL), "self-attn mismatch"

    # --- cross-attention path (exercises the S-tiled accumulator) -----------
    S, C = 16, 24
    context = jax.random.normal(k_ctx, (B, S, C), dtype=jnp.float32)
    cbound = 1.0 / (C ** 0.5)
    wkc_t = jax.random.uniform(k_ck, (C, E), minval=-cbound, maxval=cbound,
                               dtype=jnp.float32)
    wvc_t = jax.random.uniform(k_cv, (C, H), minval=-cbound, maxval=cbound,
                               dtype=jnp.float32)
    out_x = cross_attention(tokens, wq_t, wkc_t, wvc_t, context=context,
                            block_s=8)
    out_x = jax.block_until_ready(out_x)
    ref_x = _reference(tokens, wq_t, wkc_t, wvc_t, context=context)
    assert out_x.shape == (B, T, H)
    assert jnp.allclose(out_x, ref_x, atol=TOL, rtol=TOL), "cross-attn mismatch"

    print("KERNEL_OK")
</pallas_src>

<mosaic_0001>
module attributes {stable_mosaic.version = 11 : i64} {
  func.func @_self_attn_kernel(%arg0: i32, %arg1: memref<1x8x32xf32, #tpu.memory_space<vmem>>, %arg2: memref<32x160xf32, #tpu.memory_space<vmem>>, %arg3: memref<1x8x128xf32, #tpu.memory_space<vmem>>) attributes {dimension_semantics = [#tpu.dimension_semantics<parallel>], iteration_bounds = array<i64: 2>, scalar_prefetch = 0 : i64, scratch_operands = 0 : i64, tpu.core_type = #tpu.core_type<tc>, window_params = [{transform_indices = @transform_0, window_bounds = array<i64: 1, 8, 32>}, {pipeline_mode = #tpu.pipeline_mode<synchronous>, transform_indices = @transform_1, window_bounds = array<i64: 32, 160>}, {transform_indices = @transform_2, window_bounds = array<i64: 1, 8, 128>}]} {
    %c0 = arith.constant 0 : index
    %c0_0 = arith.constant 0 : index
    %c0_1 = arith.constant 0 : index
    %0 = vector.load %arg1[%c0, %c0_0, %c0_1] : memref<1x8x32xf32, #tpu.memory_space<vmem>>, vector<1x8x32xf32>
    %1 = vector.shape_cast %0 : vector<1x8x32xf32> to vector<8x32xf32>
    %c0_2 = arith.constant 0 : index
    %c0_3 = arith.constant 0 : index
    %2 = vector.load %arg2[%c0_2, %c0_3] : memref<32x160xf32, #tpu.memory_space<vmem>>, vector<32x160xf32>
    %cst = arith.constant dense<0.000000e+00> : vector<8x160xf32>
    %3 = tpu.matmul %1, %2, %cst {dimension_numbers = #tpu.dot_dimension_numbers<[1], [0], [0], [1], [0, 0, 1, 1], [], []>} : vector<8x32xf32>, vector<32x160xf32>, vector<8x160xf32> -> vector<8x160xf32>
    %4 = vector.shape_cast %3 : vector<8x160xf32> to vector<1x8x160xf32>
    %5 = vector.extract_strided_slice %4 {offsets = [0, 0, 0], sizes = [1, 8, 128], strides = [1, 1, 1]} : vector<1x8x160xf32> to vector<1x8x128xf32>
    %6 = vector.extract_strided_slice %4 {offsets = [0, 0, 128], sizes = [1, 8, 16], strides = [1, 1, 1]} : vector<1x8x160xf32> to vector<1x8x16xf32>
    %7 = vector.extract_strided_slice %4 {offsets = [0, 0, 144], sizes = [1, 8, 16], strides = [1, 1, 1]} : vector<1x8x160xf32> to vector<1x8x16xf32>
    "tpu.trace_start"() <{level = 10 : i32, message = "bte,bse->bts"}> : () -> ()
    %cst_4 = arith.constant dense<0.000000e+00> : vector<1x8x8xf32>
    %8 = tpu.matmul %6, %7, %cst_4 {dimension_numbers = #tpu.dot_dimension_numbers<[2], [2], [1], [1], [0, 0, 0, 1, 1, 1], [0], [0]>} : vector<1x8x16xf32>, vector<1x8x16xf32>, vector<1x8x8xf32> -> vector<1x8x8xf32>
    "tpu.trace_stop"() : () -> ()
    %cst_5 = arith.constant dense<0xFF800000> : vector<1x8xf32>
    %9 = vector.multi_reduction <maximumf>, %8, %cst_5 [1] : vector<1x8x8xf32> to vector<1x8xf32>
    %10 = vector.shape_cast %9 : vector<1x8xf32> to vector<1x1x8xf32>
    %11 = vector.broadcast %10 : vector<1x1x8xf32> to vector<1x8x8xf32>
    %12 = arith.subf %8, %11 : vector<1x8x8xf32>
    %13 = math.exp %12 : vector<1x8x8xf32>
    %cst_6 = arith.constant dense<0.000000e+00> : vector<1x8xf32>
    %14 = vector.multi_reduction <add>, %13, %cst_6 [1] : vector<1x8x8xf32> to vector<1x8xf32>
    %15 = vector.shape_cast %14 : vector<1x8xf32> to vector<1x1x8xf32>
    %16 = vector.broadcast %15 : vector<1x1x8xf32> to vector<1x8x8xf32>
    %17 = arith.divf %13, %16 : vector<1x8x8xf32>
    "tpu.trace_start"() <{level = 10 : i32, message = "bts,bsh->bth"}> : () -> ()
    %cst_7 = arith.constant dense<0.000000e+00> : vector<1x8x128xf32>
    %18 = tpu.matmul %17, %5, %cst_7 {dimension_numbers = #tpu.dot_dimension_numbers<[2], [1], [1], [2], [0, 0, 0, 1, 1, 2], [0], [0]>} : vector<1x8x8xf32>, vector<1x8x128xf32>, vector<1x8x128xf32> -> vector<1x8x128xf32>
    "tpu.trace_stop"() : () -> ()
    %c0_8 = arith.constant 0 : index
    %c0_9 = arith.constant 0 : index
    %c0_10 = arith.constant 0 : index
    %19 = vector.load %arg3[%c0_8, %c0_9, %c0_10] : memref<1x8x128xf32, #tpu.memory_space<vmem>>, vector<1x8x128xf32>
    tpu.vector_store %arg3[%c0_8, %c0_9, %c0_10], %18 {strides = array<i32>} : memref<1x8x128xf32, #tpu.memory_space<vmem>>, vector<1x8x128xf32>,
    return
  }
  func.func @transform_0(%arg0: i32) -> (i32, i32, i32) {
    %c0_i32 = arith.constant 0 : i32
    %c0_i32_0 = arith.constant 0 : i32
    %c0_i32_1 = arith.constant 0 : i32
    return %arg0, %c0_i32, %c0_i32_0 : i32, i32, i32
  }
  func.func @transform_1(%arg0: i32) -> (i32, i32) {
    %c0_i32 = arith.constant 0 : i32
    %c0_i32_0 = arith.constant 0 : i32
    %c0_i32_1 = arith.constant 0 : i32
    return %c0_i32, %c0_i32_0 : i32, i32
  }
  func.func @transform_2(%arg0: i32) -> (i32, i32, i32) {
    %c0_i32 = arith.constant 0 : i32
    %c0_i32_0 = arith.constant 0 : i32
    %c0_i32_1 = arith.constant 0 : i32
    return %arg0, %c0_i32, %c0_i32_0 : i32, i32, i32
  }
}

</mosaic_0001>

<llo_original>
// kernel: tpu_custom_call.1
$region0: #{tpu_custom_call.1}
  #allocation0 [shape = 'u32[]', space=smem, size = 0x4, offset = 0x4, fixed_abs, tag = 'smem constant byte address 0x4 - core index']
  #allocation1 [shape = 'u32[144,128]{1,0:T(1,128)}', space=vmem, size = 0x12000, scoped, tag = 'internal scratch']
  %s0 = inlined_call_operand.hbm [shape: f32[2,8,32], index: 0, kind: input, shape index: {}]
  %s1 = inlined_call_operand.hbm [shape: f32[32,160], index: 1, kind: input, shape index: {}]
  %s2 = inlined_call_operand.hbm [shape: f32[2,8,128], index: 2, kind: output, shape index: {}]
  %s3 = sld [smem:[#allocation0]]
  $region49: #{tpu_custom_call.1} parent=0
    _
  %s5 = ssub.s32 1, %s3
  %s6 = scalar_select 0, %s5, %s3
  $region1: #{tpu_custom_call.1} parent=0
    #allocation2 [shape = 'u8[8192]{0}', space=vmem, size = 0x2000, scoped, tag = 'input window, operand 0']
    #allocation3 [shape = 's32[2]{0}', space=sflag, size = 0x8, scoped, tag = 'scoped memory for tpu_custom_call.1']
    #allocation4 [shape = 's32[2]{0}', space=sflag, size = 0x8, scoped, tag = 'scoped memory for tpu_custom_call.1']
    #allocation5 [shape = 'u8[32768]{0}', space=vmem, size = 0x8000, scoped, tag = 'input window, operand 1, single buffered']
    #allocation6 [shape = 's32[1]{0}', space=sflag, size = 0x4, scoped, tag = 'scoped memory for tpu_custom_call.1']
    #allocation7 [shape = 'u8[8192]{0}', space=vmem, size = 0x2000, scoped, tag = 'output window, operand 0']
    %7 = vsyncpa [#allocation3], 0
    %s8 = scalar_lea.sflag [#allocation3], 1
    %9 = vsyncpa %s8, 0
    %10 = vsyncpa [#allocation6], 0
    %11 = vsyncpa [#allocation4], 0
    %s12 = scalar_lea.sflag [#allocation4], 1
    %13 = vsyncpa %s12, 0
    loop: start=0, step=1, limit=4
    $region2: #{tpu_custom_call.1} parent=1 // loop_pre_header
      _
    $region3: #{tpu_custom_call.1} parent=1 // loop_header
      %s15 = sphi 0, %s19
      %p16 = scmp.ge.s32.totalorder %s15, 4
      %s25 = sphi 0, %s27
      %s28 = sphi 0, %s25
      %s29 = sphi 0, %s28
      %s45 = sphi 0, %s29
      %s49 = sphi 0, %s49
      %s51 = sphi 0, %s49
      %s52 = sphi 0, %s51
      %s66 = sphi 0, %s52
      %s72 = sphi 0, %s74
      %s75 = sphi 0, %s72
      %s76 = sphi 0, %s75
      %s92 = sphi 0, %s76
    $region4: #{tpu_custom_call.1} parent=1 // loop_header_branch
      %18 = sbr.rel (%p16) target = $region8
    $region5: #{tpu_custom_call.1} parent=1 // loop_body
      %s20 = ssub.s32 %s15, 1
      %s21 = ssub.s32 %s15, 2
      %s22 = sadd.s32 %s15, 1
      %s23 = ssub.s32 %s15, %s22
      %p24 = scmp.eq.s32.totalorder %s23, 0
      %s26 = sadd.s32 %s25, 1
      %s27 = scalar_select %p24, %s25, %s26
      %p30 = pneg %p24
      %p31 = scmp.eq.s32.totalorder %s15, 1
      %p32 = por %p30, %p31
      %p33 = scmp.ne.s32.totalorder %s25, %s28
      %p34 = scmp.eq.s32.totalorder %s15, 0
      %p35 = por %p33, %p34
      %p36 = scmp.ne.s32.totalorder %s25, %s28
      %p37 = scmp.eq.s32.totalorder %s20, 1
      %p38 = por %p36, %p37
      %p39 = scmp.ne.s32.totalorder %s28, %s29
      %p40 = scmp.eq.s32.totalorder %s20, 0
      %p41 = por %p39, %p40
      %p42 = scmp.ne.s32.totalorder %s28, %s29
      %p43 = scmp.eq.s32.totalorder %s21, 1
      %p44 = por %p42, %p43
      %p46 = scmp.ne.s32.totalorder %s29, %s45
      %p47 = scmp.eq.s32.totalorder %s21, 0
      %p48 = por %p46, %p47
      %s50 = sadd.s32 %s49, 1
      %p53 = scmp.eq.s32.totalorder %s15, 1
      %p54 = scmp.ne.s32.totalorder %s49, %s51
      %p55 = scmp.eq.s32.totalorder %s15, 0
      %p56 = por %p54, %p55
      %p57 = scmp.ne.s32.totalorder %s49, %s51
      %p58 = scmp.eq.s32.totalorder %s20, 1
      %p59 = por %p57, %p58
      %p60 = scmp.ne.s32.totalorder %s51, %s52
      %p61 = scmp.eq.s32.totalorder %s20, 0
      %p62 = por %p60, %p61
      %p63 = scmp.ne.s32.totalorder %s51, %s52
      %p64 = scmp.eq.s32.totalorder %s21, 1
      %p65 = por %p63, %p64
      %p67 = scmp.ne.s32.totalorder %s52, %s66
      %p68 = scmp.eq.s32.totalorder %s21, 0
      %p69 = por %p67, %p68
      %s70 = ssub.s32 %s15, %s22
      %p71 = scmp.eq.s32.totalorder %s70, 0
      %s73 = sadd.s32 %s72, 1
      %s74 = scalar_select %p71, %s72, %s73
      %p77 = pneg %p71
      %p78 = scmp.eq.s32.totalorder %s15, 1
      %p79 = por %p77, %p78
      %p80 = scmp.ne.s32.totalorder %s72, %s75
      %p81 = scmp.eq.s32.totalorder %s15, 0
      %p82 = por %p80, %p81
      %p83 = scmp.ne.s32.totalorder %s72, %s75
      %p84 = scmp.eq.s32.totalorder %s20, 1
      %p85 = por %p83, %p84
      %p86 = scmp.ne.s32.totalorder %s75, %s76
      %p87 = scmp.eq.s32.totalorder %s20, 0
      %p88 = por %p86, %p87
      %p89 = scmp.ne.s32.totalorder %s75, %s76
      %p90 = scmp.eq.s32.totalorder %s21, 1
      %p91 = por %p89, %p90
      %p93 = scmp.ne.s32.totalorder %s76, %s92
      %p94 = scmp.eq.s32.totalorder %s21, 0
      %p95 = por %p93, %p94
      %p96 = scmp.le.s32.totalorder 1, %s15
      %p97 = scmp.lt.s32.totalorder %s15, 3
      %p98 = pnand %p96, %p97
      %p99 = pneg %p98
      // Predicated region
      $region9: #{tpu_custom_call.1} parent=5 // pred_check
        _
      $region10: #{tpu_custom_call.1} parent=5 // pred_check_branch
        %101 = sbr.rel (%p98) target = $region12
      $region11: #{tpu_custom_call.1} parent=5 // pred_region
        %s102 = ssub.s32 %s15, 1
        // Predicated region
        $region13: #{tpu_custom_call.1} parent=11 // pred_check
          %p103 = pneg %p62
        $region14: #{tpu_custom_call.1} parent=11 // pred_check_branch
          %105 = sbr.rel (%p103) target = $region16
        $region15: #{tpu_custom_call.1} parent=11 // pred_region
          %s107 = ssub.s32 1024, 1024
          %108 = vsyncadd [#allocation6], %s107
          %s109 = sshll.u32 [#allocation5], 4
          %s110 = int_to_ptr.vmem [resolvable:$true] %s109
          %115 = dma.hbm_to_vmem [thread:$0]  %s1, 1024, %s110, [#allocation6], 256, 256, 16
        $region16: #{tpu_custom_call.1} parent=11 // pred_fallthru
          _
      $region12: #{tpu_custom_call.1} parent=5 // pred_fallthru
        _
      %p116 = scmp.lt.s32.totalorder %s15, 2
      // Predicated region
      $region17: #{tpu_custom_call.1} parent=5 // pred_check
        %p117 = pneg %p116
      $region18: #{tpu_custom_call.1} parent=5 // pred_check_branch
        %119 = sbr.rel (%p117) target = $region20
      $region19: #{tpu_custom_call.1} parent=5 // pred_region
        // Predicated region
        $region21: #{tpu_custom_call.1} parent=19 // pred_check
          %p120 = pneg %p35
        $region22: #{tpu_custom_call.1} parent=19 // pred_check_branch
          %122 = sbr.rel (%p120) target = $region24
        $region23: #{tpu_custom_call.1} parent=19 // pred_region
          %s123 = sand.u32 %s25, 1
          %s124 = scalar_lea.sflag [#allocation3], %s123
          %s125 = sand.u32 %s25, 1
          %s126 = smul.addr %s125, 8
          %s127 = scalar_lea.vmem [#allocation2], %s126
          %s129 = ssub.s32 128, 128
          %130 = vsyncadd %s124, %s129
          %s131 = smul.addr %s15, 128
          %s132 = scalar_lea.hbm %s0, %s131
          %s134 = sshll.u32 %s127, 4
          %s135 = int_to_ptr.vmem [resolvable:$true] %s134
          %137 = dma.hbm_to_vmem [thread:$0]  %s132, 128, %s135, %s124
        $region24: #{tpu_custom_call.1} parent=19 // pred_fallthru
          _
      $region20: #{tpu_custom_call.1} parent=5 // pred_fallthru
        _
      %p138 = scmp.le.s32.totalorder 1, %s15
      %p139 = scmp.lt.s32.totalorder %s15, 3
      %p140 = pnand %p138, %p139
      %p141 = pneg %p140
      // Predicated region
      $region25: #{tpu_custom_call.1} parent=5 // pred_check
        _
      $region26: #{tpu_custom_call.1} parent=5 // pred_check_branch
        %143 = sbr.rel (%p140) target = $region28
      $region27: #{tpu_custom_call.1} parent=5 // pred_region
        %s144 = ssub.s32 %s15, 1
        %s145 = sand.u32 %s28, 1
        %s146 = scalar_lea.sflag [#allocation3], %s145
        %s147 = sand.u32 %s28, 1
        %s148 = smul.addr %s147, 8
        %s149 = scalar_lea.vmem [#allocation2], %s148
        // Predicated region
        $region29: #{tpu_custom_call.1} parent=27 // pred_check
          %p150 = pneg %p41
        $region30: #{tpu_custom_call.1} parent=27 // pred_check_branch
          %152 = sbr.rel (%p150) target = $region32
        $region31: #{tpu_custom_call.1} parent=27 // pred_region
          %153 = dma.done %s146, 128
        $region32: #{tpu_custom_call.1} parent=27 // pred_fallthru
          _
        // Predicated region
        $region33: #{tpu_custom_call.1} parent=27 // pred_check
          %p154 = pneg %p62
        $region34: #{tpu_custom_call.1} parent=27 // pred_check_branch
          %156 = sbr.rel (%p154) target = $region36
        $region35: #{tpu_custom_call.1} parent=27 // pred_region
          %157 = dma.done [#allocation6], 1024
        $region36: #{tpu_custom_call.1} parent=27 // pred_fallthru
          _
        %s158 = sand.u32 %s28, 1
        %s159 = scalar_lea.sflag [#allocation3], %s158
        %s160 = sand.u32 %s28, 1
        %s161 = smul.addr %s160, 8
        %s162 = scalar_lea.vmem [#allocation2], %s161
        %p163 = pneg %p41
        %p164 = pneg %p38
        %p165 = pneg %p62
        %p166 = pneg %p59
        %p167 = pneg %p88
        %p168 = pneg %p85
        %s169 = sand.u32 %s75, 1
        %s170 = scalar_lea.sflag [#allocation4], %s169
        %s171 = sand.u32 %s75, 1
        %s172 = smul.addr %s171, 8
        %s173 = scalar_lea.vmem [#allocation7], %s172
        %v174 = vld [vmem:[%s149] sm:$0xff]
        %v175 = vld [vmem:[#allocation5] sm:$0xff]
        %v176 = vld [vmem:[#allocation5 + $0x8] sm:$0xff]
        %v177 = vld [vmem:[#allocation5 + $0x10] sm:$0xff]
        %v178 = vld [vmem:[#allocation5 + $0x18] sm:$0xff]
        %v179 = vld [vmem:[#allocation5 + $0x20] sm:$0xff]
        %v180 = vld [vmem:[#allocation5 + $0x28] sm:$0xff]
        %v181 = vld [vmem:[#allocation5 + $0x30] sm:$0xff]
        %v182 = vld [vmem:[#allocation5 + $0x38] sm:$0xff]
        %vm183 = vcmask 261120
        %v185 = vsel %vm183, %v174, 0
        %187 = vmatprep.subr.mxu0 0.0
        %188 = vmatpush1.msra.mxu0 0.0
        %189 = vmatprep.subr.mxu0 0.0
        %190 = vmatpush1.msra.mxu0 0.0
        %191 = vmatprep.subr.mxu0 0.0
        %192 = vmatpush1.msra.mxu0 0.0
        %193 = vmatprep.subr.mxu0 0.0
        %194 = vmatpush1.msra.mxu0 0.0
        %195 = vmatprep.subr.mxu0 0.0
        %196 = vmatpush1.msra.mxu0 0.0
        %197 = vmatprep.subr.mxu0 0.0
        %198 = vmatpush1.msra.mxu0 0.0
        %199 = vmatprep.subr.mxu0 0.0
        %200 = vmatpush1.msra.mxu0 0.0
        %201 = vmatprep.subr.mxu0 0.0
        %202 = vmatpush1.msra.mxu0 0.0
        %203 = vmatprep.subr.mxu0 0.0
        %204 = vmatpush1.msra.mxu0 0.0
        %205 = vmatprep.subr.mxu0 0.0
        %206 = vmatpush1.msra.mxu0 0.0
        %207 = vmatprep.subr.mxu0 0.0
        %208 = vmatpush1.msra.mxu0 0.0
        %209 = vmatprep.subr.mxu0 0.0
        %210 = vmatpush1.msra.mxu0 0.0
        %211 = vmatprep.subr.mxu0 %v182
        %212 = vmatpush1.msra.mxu0 %v181
        %213 = vmatprep.subr.mxu0 %v180
        %214 = vmatpush1.msra.mxu0 %v179
        %215 = vmatprep.subr.mxu0 %v178
        %216 = vmatpush1.msra.mxu0 %v177
        %217 = vmatprep.subr.mxu0 %v176
        %218 = vmatpush1.msra.mxu0 %v175
        %219 = vmatprep.subr.mxu0 0.0
        %220 = vmatpush2.msra.mxu0 0.0
        %221 = vmatprep.subr.mxu0 0.0
        %222 = vmatpush2.msra.mxu0 0.0
        %223 = vmatprep.subr.mxu0 0.0
        %224 = vmatpush2.msra.mxu0 0.0
        %225 = vmatprep.subr.mxu0 0.0
        %226 = vmatpush2.msra.mxu0 0.0
        %227 = vmatprep.subr.mxu0 0.0
        %228 = vmatpush2.msra.mxu0 0.0
        %229 = vmatprep.subr.mxu0 0.0
        %230 = vmatpush2.msra.mxu0 0.0
        %231 = vmatprep.subr.mxu0 0.0
        %232 = vmatpush2.msra.mxu0 0.0
        %233 = vmatprep.subr.mxu0 0.0
        %234 = vmatpush2.msra.mxu0 0.0
        %235 = vmatprep.subr.mxu0 0.0
        %236 = vmatpush2.msra.mxu0 0.0
        %237 = vmatprep.subr.mxu0 0.0
        %238 = vmatpush2.msra.mxu0 0.0
        %239 = vmatprep.subr.mxu0 0.0
        %240 = vmatpush2.msra.mxu0 0.0
        %241 = vmatprep.subr.mxu0 0.0
        %242 = vmatpush2.msra.mxu0 0.0
        %243 = vmatprep.subr.mxu0 0.0
        %244 = vmatpush2.msra.mxu0 0.0
        %245 = vmatprep.subr.mxu0 0.0
        %246 = vmatpush2.msra.mxu0 0.0
        %247 = vmatprep.subr.mxu0 0.0
        %248 = vmatpush2.msra.mxu0 0.0
        %249 = vmatprep.subr.mxu0 0.0
        %250 = vmatpush2.msra.mxu0 0.0
        %251 = vmatprep.mubr.f32.mxu0 0.0
        %252 = vmatmul.mubr.f32.gmra.mxu0 %v185
        %v253 = vpop.f32.mrf.mxu0
        %v254 = vadd.f32 0.0, %v253
        %v255 = vpop.f32.mrf.mxu0
        %v256 = vadd.f32 0.0, %v255
        %257 = vdwg.mxu0
        %259 = vrot.lane.b32.xlu0 %v256, 112
        %v260 = vpop.permute.xlu0 %259
        %vm261 = vcmask 130048
        %v262 = vsel %vm261, %v256, 0
        %v264 = vsel %vm261, %v260, 0
        %266 = vmatprep.subr.mxu0 0.0
        %267 = vmatpush1.xpose.msra.mxu0 0.0
        %268 = vmatprep.subr.mxu0 0.0
        %269 = vmatpush1.xpose.msra.mxu0 0.0
        %270 = vmatprep.subr.mxu0 0.0
        %271 = vmatpush1.xpose.msra.mxu0 0.0
        %272 = vmatprep.subr.mxu0 0.0
        %273 = vmatpush1.xpose.msra.mxu0 0.0
        %274 = vmatprep.subr.mxu0 0.0
        %275 = vmatpush1.xpose.msra.mxu0 0.0
        %276 = vmatprep.subr.mxu0 0.0
        %277 = vmatpush1.xpose.msra.mxu0 0.0
        %278 = vmatprep.subr.mxu0 0.0
        %279 = vmatpush1.xpose.msra.mxu0 0.0
        %280 = vmatprep.subr.mxu0 0.0
        %281 = vmatpush1.xpose.msra.mxu0 0.0
        %282 = vmatprep.subr.mxu0 0.0
        %283 = vmatpush1.xpose.msra.mxu0 0.0
        %284 = vmatprep.subr.mxu0 0.0
        %285 = vmatpush1.xpose.msra.mxu0 0.0
        %286 = vmatprep.subr.mxu0 0.0
        %287 = vmatpush1.xpose.msra.mxu0 0.0
        %288 = vmatprep.subr.mxu0 0.0
        %289 = vmatpush1.xpose.msra.mxu0 0.0
        %290 = vmatprep.subr.mxu0 0.0
        %291 = vmatpush1.xpose.msra.mxu0 0.0
        %292 = vmatprep.subr.mxu0 0.0
        %293 = vmatpush1.xpose.msra.mxu0 0.0
        %294 = vmatprep.subr.mxu0 0.0
        %295 = vmatpush1.xpose.msra.mxu0 0.0
        %296 = vmatprep.subr.mxu0 0.0
        %297 = vmatpush1.xpose.msra.mxu0 %v264
        %298 = vmatprep.subr.mxu0 0.0
        %299 = vmatpush2.xpose.msra.mxu0 0.0
        %300 = vmatprep.subr.mxu0 0.0
        %301 = vmatpush2.xpose.msra.mxu0 0.0
        %302 = vmatprep.subr.mxu0 0.0
        %303 = vmatpush2.xpose.msra.mxu0 0.0
        %304 = vmatprep.subr.mxu0 0.0
        %305 = vmatpush2.xpose.msra.mxu0 0.0
        %306 = vmatprep.subr.mxu0 0.0
        %307 = vmatpush2.xpose.msra.mxu0 0.0
        %308 = vmatprep.subr.mxu0 0.0
        %309 = vmatpush2.xpose.msra.mxu0 0.0
        %310 = vmatprep.subr.mxu0 0.0
        %311 = vmatpush2.xpose.msra.mxu0 0.0
        %312 = vmatprep.subr.mxu0 0.0
        %313 = vmatpush2.xpose.msra.mxu0 0.0
        %314 = vmatprep.subr.mxu0 0.0
        %315 = vmatpush2.xpose.msra.mxu0 0.0
        %316 = vmatprep.subr.mxu0 0.0
        %317 = vmatpush2.xpose.msra.mxu0 0.0
        %318 = vmatprep.subr.mxu0 0.0
        %319 = vmatpush2.xpose.msra.mxu0 0.0
        %320 = vmatprep.subr.mxu0 0.0
        %321 = vmatpush2.xpose.msra.mxu0 0.0
        %322 = vmatprep.subr.mxu0 0.0
        %323 = vmatpush2.xpose.msra.mxu0 0.0
        %324 = vmatprep.subr.mxu0 0.0
        %325 = vmatpush2.xpose.msra.mxu0 0.0
        %326 = vmatprep.subr.mxu0 0.0
        %327 = vmatpush2.xpose.msra.mxu0 0.0
        %328 = vmatprep.subr.mxu0 0.0
        %329 = vmatpush2.xpose.msra.mxu0 0.0
        %330 = vmatprep.mubr.f32.mxu0 0.0
        %331 = vmatmul.mubr.f32.gmra.mxu0 %v262
        %v332 = vpop.f32.mrf.mxu0
        %v333 = vadd.f32 0.0, %v332
        %v334 = vpop.f32.mrf.mxu0
        %335 = vdwg.mxu0
        %vm336 = vcmask 64512
        %v337 = vsel %vm336, %v333, -inf
        %v338 = vrot.slane %v337, 4
        %v339 = vmax.f32 %v337, %v338
        %v340 = vrot.slane %v339, 2
        %v341 = vmax.f32 %v339, %v340
        %v342 = vrot.slane %v341, 1
        %v343 = vmax.f32 %v341, %v342
        %v344 = vsub.f32 %v333, %v343
        %v345 = vmul.f32 %v344, 1.442695
        %v346 = vpow.pop %v345
        %v347 = vsel %vm336, %v346, 0.0
        %v348 = vrot.slane %v347, 4
        %v349 = vadd.f32 %v347, %v348
        %v350 = vrot.slane %v349, 2
        %v351 = vadd.f32 %v349, %v350
        %v352 = vrot.slane %v351, 1
        %v353 = vadd.f32 %v351, %v352
        %v354 = vrcp.pop %v353
        %v355 = vmul.f32 %v346, %v354
        %v357 = vsel %vm336, %v355, 0
        %359 = vmatprep.subr.mxu0 0.0
        %360 = vmatpush1.msra.mxu0 0.0
        %361 = vmatprep.subr.mxu0 0.0
        %362 = vmatpush1.msra.mxu0 0.0
        %363 = vmatprep.subr.mxu0 0.0
        %364 = vmatpush1.msra.mxu0 0.0
        %365 = vmatprep.subr.mxu0 0.0
        %366 = vmatpush1.msra.mxu0 0.0
        %367 = vmatprep.subr.mxu0 0.0
        %368 = vmatpush1.msra.mxu0 0.0
        %369 = vmatprep.subr.mxu0 0.0
        %370 = vmatpush1.msra.mxu0 0.0
        %371 = vmatprep.subr.mxu0 0.0
        %372 = vmatpush1.msra.mxu0 0.0
        %373 = vmatprep.subr.mxu0 0.0
        %374 = vmatpush1.msra.mxu0 0.0
        %375 = vmatprep.subr.mxu0 0.0
        %376 = vmatpush1.msra.mxu0 0.0
        %377 = vmatprep.subr.mxu0 0.0
        %378 = vmatpush1.msra.mxu0 0.0
        %379 = vmatprep.subr.mxu0 0.0
        %380 = vmatpush1.msra.mxu0 0.0
        %381 = vmatprep.subr.mxu0 0.0
        %382 = vmatpush1.msra.mxu0 0.0
        %383 = vmatprep.subr.mxu0 0.0
        %384 = vmatpush1.msra.mxu0 0.0
        %385 = vmatprep.subr.mxu0 0.0
        %386 = vmatpush1.msra.mxu0 0.0
        %387 = vmatprep.subr.mxu0 0.0
        %388 = vmatpush1.msra.mxu0 0.0
        %389 = vmatprep.subr.mxu0 0.0
        %390 = vmatpush1.msra.mxu0 %v254
        %391 = vmatprep.subr.mxu0 0.0
        %392 = vmatpush2.msra.mxu0 0.0
        %393 = vmatprep.subr.mxu0 0.0
        %394 = vmatpush2.msra.mxu0 0.0
        %395 = vmatprep.subr.mxu0 0.0
        %396 = vmatpush2.msra.mxu0 0.0
        %397 = vmatprep.subr.mxu0 0.0
        %398 = vmatpush2.msra.mxu0 0.0
        %399 = vmatprep.subr.mxu0 0.0
        %400 = vmatpush2.msra.mxu0 0.0
        %401 = vmatprep.subr.mxu0 0.0
        %402 = vmatpush2.msra.mxu0 0.0
        %403 = vmatprep.subr.mxu0 0.0
        %404 = vmatpush2.msra.mxu0 0.0
        %405 = vmatprep.subr.mxu0 0.0
        %406 = vmatpush2.msra.mxu0 0.0
        %407 = vmatprep.subr.mxu0 0.0
        %408 = vmatpush2.msra.mxu0 0.0
        %409 = vmatprep.subr.mxu0 0.0
        %410 = vmatpush2.msra.mxu0 0.0
        %411 = vmatprep.subr.mxu0 0.0
        %412 = vmatpush2.msra.mxu0 0.0
        %413 = vmatprep.subr.mxu0 0.0
        %414 = vmatpush2.msra.mxu0 0.0
        %415 = vmatprep.subr.mxu0 0.0
        %416 = vmatpush2.msra.mxu0 0.0
        %417 = vmatprep.subr.mxu0 0.0
        %418 = vmatpush2.msra.mxu0 0.0
        %419 = vmatprep.subr.mxu0 0.0
        %420 = vmatpush2.msra.mxu0 0.0
        %421 = vmatprep.subr.mxu0 0.0
        %422 = vmatpush2.msra.mxu0 0.0
        %423 = vmatprep.mubr.f32.mxu0 0.0
        %424 = vmatmul.mubr.f32.gmra.mxu0 %v357
        %v425 = vpop.f32.mrf.mxu0
        %v426 = vadd.f32 0.0, %v425
        %v427 = vpop.f32.mrf.mxu0
        %428 = vdwg.mxu0
        %429 = vst [vmem:[%s173] sm:$0xff] %v426
        %s430 = sand.u32 %s75, 1
        %s431 = scalar_lea.sflag [#allocation4], %s430
        %s432 = sand.u32 %s75, 1
        %s433 = smul.addr %s432, 8
        %s434 = scalar_lea.vmem [#allocation7], %s433
        // Predicated region
        $region37: #{tpu_custom_call.1} parent=27 // pred_check
          %p435 = pneg %p85
        $region38: #{tpu_custom_call.1} parent=27 // pred_check_branch
          %437 = sbr.rel (%p435) target = $region40
        $region39: #{tpu_custom_call.1} parent=27 // pred_region
          %s439 = ssub.s32 128, 128
          %440 = vsyncadd %s431, %s439
          %s441 = smul.addr %s20, 128
          %s442 = scalar_lea.hbm %s2, %s441
          %s444 = sshll.u32 %s434, 4
          %s445 = int_to_ptr.vmem [resolvable:$true] %s444
          %447 = dma.vmem_to_hbm [thread:$0]  %s445, 128, %s442, %s431
        $region40: #{tpu_custom_call.1} parent=27 // pred_fallthru
          _
      $region28: #{tpu_custom_call.1} parent=5 // pred_fallthru
        _
      %p448 = scmp.le.s32.totalorder 2, %s15
      // Predicated region
      $region41: #{tpu_custom_call.1} parent=5 // pred_check
        %p449 = pneg %p448
      $region42: #{tpu_custom_call.1} parent=5 // pred_check_branch
        %451 = sbr.rel (%p449) target = $region44
      $region43: #{tpu_custom_call.1} parent=5 // pred_region
        %s452 = ssub.s32 %s15, 2
        // Predicated region
        $region45: #{tpu_custom_call.1} parent=43 // pred_check
          %p453 = pneg %p91
        $region46: #{tpu_custom_call.1} parent=43 // pred_check_branch
          %455 = sbr.rel (%p453) target = $region48
        $region47: #{tpu_custom_call.1} parent=43 // pred_region
          %s456 = sand.u32 %s76, 1
          %s457 = scalar_lea.sflag [#allocation4], %s456
          %s458 = sand.u32 %s76, 1
          %s459 = smul.addr %s458, 8
          %s460 = scalar_lea.vmem [#allocation7], %s459
          %461 = dma.done %s457, 128
        $region48: #{tpu_custom_call.1} parent=43 // pred_fallthru
          _
      $region44: #{tpu_custom_call.1} parent=5 // pred_fallthru
        _
    $region6: #{tpu_custom_call.1} parent=1 // loop_footer
      %s19 = sadd.s32 1, %s15
    $region7: #{tpu_custom_call.1} parent=1 // loop_footer_branch
      %14 = sbr.rel target = $region3
    $region8: #{tpu_custom_call.1} parent=1 // loop_exit
      _
    %462 = vsyncpa [#allocation3], 1
    %s463 = scalar_lea.sflag [#allocation3], 1
    %464 = vsyncpa %s463, 1
    %465 = vsyncpa [#allocation6], 1
    %466 = vsyncpa [#allocation4], 1
    %s467 = scalar_lea.sflag [#allocation4], 1
    %468 = vsyncpa %s467, 1

</llo_original>
